<compile_context>
chip_gen: v7x
topology: tpu7x:2x2x1
jax: 0.10.0
libtpu: 0.0.40
codegen_flags: <defaults>
</compile_context>

<pallas_src>
import functools

import numpy as np
import jax
import jax.numpy as jnp
from jax.experimental import pallas as pl
from jax.experimental.pallas import tpu as pltpu

LEAKY_SLOPE = 0.2
NEG_BIG = -1e30
VMEM_LIMIT_BYTES = 32 * 1024 * 1024  # raise v5e's 16 MiB default; safe on v6e/v7x


def _xw_kernel(x_ref, w_all_ref, xw_ref):
    """Pass 0: xw_all = x @ [w1 | w1@wc] for one row block (computed once, not per A_hat block).

    x_ref   : [TI, Fin] f32
    w_all   : [Fin, C+H] f32
    xw_ref  : [TI, C+H]  bf16 (bf16 output halves the HBM stream into pass 1)
    """
    xw_ref[...] = jnp.dot(x_ref[...], w_all_ref[...],
                          preferred_element_type=jnp.float32).astype(jnp.bfloat16)


def _gcn_kernel(a_hat_ref, xw_ref, b_all_ref, logits_ref, h_ref, h_t_ref, *, num_class):
    """Pass 1: backbone GCN + calibration projection for one destination-row block.

    a_hat_ref : [TI, N]     bf16 row block of D^-1/2 (A+I) D^-1/2
    xw_ref    : [N, C + H]  bf16 = x @ [w1 | w1@wc]  (whole, VMEM-resident)
    b_all_ref : [1,  C + H] f32  = [b1 | b1 @ wc]
    outputs   : logits [TI, C], h [TI, H], h^T [H, TI]
    """
    row = jnp.dot(a_hat_ref[...], xw_ref[...],
                  preferred_element_type=jnp.float32)                # [TI, C+H]
    row = row + b_all_ref[...]
    h = row[:, num_class:]                                           # [TI, H]
    logits_ref[...] = row[:, :num_class]                             # [TI, C]
    h_ref[...] = h
    h_t_ref[...] = h.T                                               # [H, TI]


def _attention_kernel(a_hat_ref, logits_ref, h_blk_ref, h_t_ref,
                      a_src_ref, a_dst_ref, bias_ref,
                      calib_ref, temp_ref, *, heads):
    """Pass 2: GAT-style calibration attention + temperature scaling for one row block."""
    ti = temp_ref.shape[0]
    # Additive neighbor mask (A+I > 0), hoisted out of the per-head loop.
    mask_bias = jnp.where(a_hat_ref[...] > 0, 0.0, jnp.float32(NEG_BIG))   # [TI, N]

    logits = logits_ref[...]                    # [TI, C]
    h_blk = h_blk_ref[...]                      # [TI, H]  (destination rows)
    h_t = h_t_ref[...]                          # [H, N]   (all source nodes, lane-dense)
    a_src = a_src_ref[...]                      # [1, H]
    a_dst = a_dst_ref[...]                      # [1, H]

    acc = jnp.zeros((ti, 1), jnp.float32)
    # Static per-head unroll: all O(N^2) work stays on 2-D [TI, N] tiles with the
    # neighbor axis on the 128 lanes (no [N, N, H] intermediates).
    for k in range(heads):
        alpha_dst = h_blk[:, k:k + 1] * a_dst[0:1, k:k + 1]          # [TI, 1]
        alpha_src = h_t[k:k + 1, :] * a_src[0:1, k:k + 1]            # [1, N]
        s = alpha_dst + alpha_src                                    # [TI, N]
        s = jnp.maximum(s, LEAKY_SLOPE * s) + mask_bias              # leaky-relu + mask
        m = jnp.max(s, axis=1, keepdims=True)                        # [TI, 1]
        p = jnp.exp(s - m)                 # masked entries underflow to exactly 0
        denom = jnp.sum(p, axis=1, keepdims=True)                    # [TI, 1]
        # MXU neighbor aggregation: raw_k[i] = sum_j p[i, j] * h[j, k]
        raw_k = jax.lax.dot_general(
            p, h_t[k:k + 1, :],
            dimension_numbers=(((1,), (1,)), ((), ())),
            preferred_element_type=jnp.float32)                      # [TI, 1]
        # Fold softmax normalization into the narrow [TI, 1] result (EUP reciprocal).
        acc = acc + raw_k * pl.reciprocal(denom, approx=True)

    t_pre = acc * jnp.float32(1.0 / heads) + bias_ref[...]           # [TI, 1]
    # softplus -> positive per-node temperature
    temperature = (jnp.maximum(t_pre, 0.0)
                   + jnp.log(1.0 + jnp.exp(-jnp.abs(t_pre)))
                   + jnp.float32(1e-6))
    temp_ref[...] = temperature
    # temperature.expand(N, C) then logits / temperature == broadcasted divide
    calib_ref[...] = logits / temperature                            # [TI, C]


def gats_forward(x, a_hat, params, *, row_tile=None):
    N, Fin = x.shape
    C = params["w1"].shape[1]
    H = params["wc"].shape[1]

    if row_tile is None:
        # Largest row block that keeps the double-buffered bf16 A_hat block plus a
        # few live [TI, N] f32 temporaries inside the scoped VMEM limit (all chips).
        row_tile = N if N <= 256 else 128
    ti = row_tile
    assert N % ti == 0, "num_nodes must be divisible by the row tile"
    grid = (N // ti,)

    # Halve the dominant N^2 DMA stream: bf16 adjacency, f32 MXU accumulation.
    a_hat_bf16 = a_hat.astype(jnp.bfloat16)

    # Fuse the tiny projections once: x @ [w1 | w1@wc] -> [logits_pre | h_pre].
    w_all = jnp.concatenate([params["w1"], params["w1"] @ params["wc"]], axis=1)
    b_all = jnp.concatenate([params["b1"], params["b1"] @ params["wc"]], axis=1)

    cparams = pltpu.CompilerParams(
        dimension_semantics=("parallel",),          # shard row blocks over v7x's 2 TCs
        vmem_limit_bytes=VMEM_LIMIT_BYTES)

    # Pass 0: xw_all = x @ w_all (hoisted; computed exactly once per node row).
    xw_all = pl.pallas_call(
        _xw_kernel,
        out_shape=jax.ShapeDtypeStruct((N, C + H), jnp.bfloat16),
        grid=grid,
        in_specs=[
            pl.BlockSpec((ti, Fin), lambda i: (i, 0)),       # x row block
            pl.BlockSpec((Fin, C + H), lambda i: (0, 0)),    # fused weights (whole)
        ],
        out_specs=pl.BlockSpec((ti, C + H), lambda i: (i, 0)),
        compiler_params=cparams,
    )(x, w_all)

    # Pass 1: per-node logits and attention features (streams A_hat row blocks).
    logits, h, h_t = pl.pallas_call(
        functools.partial(_gcn_kernel, num_class=C),
        out_shape=(jax.ShapeDtypeStruct((N, C), jnp.float32),
                   jax.ShapeDtypeStruct((N, H), jnp.float32),
                   jax.ShapeDtypeStruct((H, N), jnp.float32)),
        grid=grid,
        in_specs=[
            pl.BlockSpec((ti, N), lambda i: (i, 0)),         # A_hat row block (bf16)
            pl.BlockSpec((N, C + H), lambda i: (0, 0)),      # xw_all (whole, tiny, bf16)
            pl.BlockSpec((1, C + H), lambda i: (0, 0)),      # fused bias
        ],
        out_specs=(
            pl.BlockSpec((ti, C), lambda i: (i, 0)),
            pl.BlockSpec((ti, H), lambda i: (i, 0)),
            pl.BlockSpec((H, ti), lambda i: (0, i)),
        ),
        compiler_params=cparams,
    )(a_hat_bf16, xw_all, b_all)

    # Pass 2: masked attention softmax + temperature + calibrated logits.
    calibrated, temperature = pl.pallas_call(
        functools.partial(_attention_kernel, heads=H),
        out_shape=(jax.ShapeDtypeStruct((N, C), jnp.float32),
                   jax.ShapeDtypeStruct((N, 1), jnp.float32)),
        grid=grid,
        in_specs=[
            pl.BlockSpec((ti, N), lambda i: (i, 0)),         # A_hat row block (mask source)
            pl.BlockSpec((ti, C), lambda i: (i, 0)),         # logits row block
            pl.BlockSpec((ti, H), lambda i: (i, 0)),         # h row block (dst features)
            pl.BlockSpec((H, N), lambda i: (0, 0)),          # h^T (whole: src rows / agg rhs)
            pl.BlockSpec((1, H), lambda i: (0, 0)),          # a_src
            pl.BlockSpec((1, H), lambda i: (0, 0)),          # a_dst
            pl.BlockSpec((1, 1), lambda i: (0, 0)),          # temperature-head bias
        ],
        out_specs=(
            pl.BlockSpec((ti, C), lambda i: (i, 0)),
            pl.BlockSpec((ti, 1), lambda i: (i, 0)),
        ),
        compiler_params=cparams,
    )(a_hat_bf16, logits, h, h_t,
      params["a_src"], params["a_dst"], params["bias"])

    return calibrated, temperature


def gats_reference(x, a_hat, params):
    """Pure-JAX reference (same bf16-rounded adjacency as the kernel)."""
    a = a_hat.astype(jnp.bfloat16).astype(jnp.float32)
    logits = a @ (x @ params["w1"]) + params["b1"]
    h = logits @ params["wc"]
    alpha_src = h * params["a_src"]
    alpha_dst = h * params["a_dst"]
    scores = alpha_dst[:, None, :] + alpha_src[None, :, :]
    scores = jnp.where(scores >= 0, scores, LEAKY_SLOPE * scores)
    mask = (a > 0)[:, :, None]
    scores = jnp.where(mask, scores, -1e30)
    attn = jax.nn.softmax(scores, axis=1)
    out = jnp.sum(attn * h[None, :, :], axis=1)
    t_pre = jnp.mean(out, axis=1, keepdims=True) + params["bias"]
    temperature = jax.nn.softplus(t_pre) + 1e-6
    return logits / temperature, temperature


if __name__ == "__main__":
    # small shapes: num_nodes=32, in_features=16, num_class=8, heads=4
    N, Fin, C, H = 32, 16, 8, 4

    key = jax.random.PRNGKey(0)
    kx, kw1, kwc, ka1, ka2 = jax.random.split(key, 5)

    x = jax.random.normal(kx, (N, Fin), jnp.float32)

    # deterministic ring graph edge_index (undirected)
    src = np.arange(N)
    dst = (np.arange(N) + 1) % N
    edge_index = np.stack([np.concatenate([src, dst]),
                           np.concatenate([dst, src])], axis=0)

    A = np.zeros((N, N), np.float32)
    A[edge_index[0], edge_index[1]] = 1.0
    A_self = A + np.eye(N, dtype=np.float32)          # self loops guarantee nonempty rows
    deg = A_self.sum(axis=1)
    dinv = 1.0 / np.sqrt(deg)
    a_hat = jnp.asarray(dinv[:, None] * A_self * dinv[None, :])   # sym-normalized adj

    params = {
        "w1":    jax.random.normal(kw1, (Fin, C), jnp.float32) / np.sqrt(Fin),
        "b1":    jnp.zeros((1, C), jnp.float32),
        "wc":    jax.random.normal(kwc, (C, H), jnp.float32) / np.sqrt(C),
        "a_src": jax.random.normal(ka1, (1, H), jnp.float32),
        "a_dst": jax.random.normal(ka2, (1, H), jnp.float32),
        "bias":  jnp.ones((1, 1), jnp.float32),   # gats_args.bias -> temperature-head bias
    }

    calibrated, temperature = gats_forward(x, a_hat, params)
    jax.block_until_ready((calibrated, temperature))

    assert calibrated.shape == (N, C)
    assert temperature.shape == (N, 1)
    assert bool(jnp.all(temperature > 0.0))
    assert bool(jnp.all(jnp.isfinite(calibrated)))

    ref_calib, ref_temp = gats_reference(x, a_hat, params)
    np.testing.assert_allclose(np.asarray(calibrated), np.asarray(ref_calib),
                               rtol=8e-2, atol=3e-2)
    np.testing.assert_allclose(np.asarray(temperature), np.asarray(ref_temp),
                               rtol=8e-2, atol=3e-2)
    print("KERNEL_OK")
</pallas_src>

<mosaic_0001>
module attributes {stable_mosaic.version = 11 : i64} {
  func.func @_xw_kernel(%arg0: i32, %arg1: memref<32x16xf32, #tpu.memory_space<vmem>>, %arg2: memref<16x12xf32, #tpu.memory_space<vmem>>, %arg3: memref<32x12xbf16, #tpu.memory_space<vmem>>) attributes {dimension_semantics = [#tpu.dimension_semantics<parallel>], iteration_bounds = array<i64: 1>, scalar_prefetch = 0 : i64, scratch_operands = 0 : i64, tpu.core_type = #tpu.core_type<tc>, window_params = [{transform_indices = @transform_0, window_bounds = array<i64: 32, 16>}, {pipeline_mode = #tpu.pipeline_mode<synchronous>, transform_indices = @transform_1, window_bounds = array<i64: 16, 12>}, {transform_indices = @transform_2, window_bounds = array<i64: 32, 12>}]} {
    %c0 = arith.constant 0 : index
    %c0_0 = arith.constant 0 : index
    %0 = vector.load %arg1[%c0, %c0_0] : memref<32x16xf32, #tpu.memory_space<vmem>>, vector<32x16xf32>
    %c0_1 = arith.constant 0 : index
    %c0_2 = arith.constant 0 : index
    %1 = vector.load %arg2[%c0_1, %c0_2] : memref<16x12xf32, #tpu.memory_space<vmem>>, vector<16x12xf32>
    %cst = arith.constant dense<0.000000e+00> : vector<32x12xf32>
    %2 = tpu.matmul %0, %1, %cst {dimension_numbers = #tpu.dot_dimension_numbers<[1], [0], [0], [1], [0, 0, 1, 1], [], []>} : vector<32x16xf32>, vector<16x12xf32>, vector<32x12xf32> -> vector<32x12xf32>
    %3 = arith.truncf %2 : vector<32x12xf32> to vector<32x12xbf16>
    %c0_3 = arith.constant 0 : index
    %c0_4 = arith.constant 0 : index
    %4 = vector.load %arg3[%c0_3, %c0_4] : memref<32x12xbf16, #tpu.memory_space<vmem>>, vector<32x12xbf16>
    tpu.vector_store %arg3[%c0_3, %c0_4], %3 {strides = array<i32>} : memref<32x12xbf16, #tpu.memory_space<vmem>>, vector<32x12xbf16>,
    return
  }
  func.func @transform_0(%arg0: i32) -> (i32, i32) {
    %c0_i32 = arith.constant 0 : i32
    %c0_i32_0 = arith.constant 0 : i32
    return %arg0, %c0_i32 : i32, i32
  }
  func.func @transform_1(%arg0: i32) -> (i32, i32) {
    %c0_i32 = arith.constant 0 : i32
    %c0_i32_0 = arith.constant 0 : i32
    %c0_i32_1 = arith.constant 0 : i32
    return %c0_i32, %c0_i32_0 : i32, i32
  }
  func.func @transform_2(%arg0: i32) -> (i32, i32) {
    %c0_i32 = arith.constant 0 : i32
    %c0_i32_0 = arith.constant 0 : i32
    return %arg0, %c0_i32 : i32, i32
  }
}

</mosaic_0001>

<llo_original>
// kernel: tpu_custom_call.1
$region0: #{tpu_custom_call.1}
  #allocation0 [shape = 'u32[]', space=smem, size = 0x4, offset = 0x4, fixed_abs, tag = 'smem constant byte address 0x4 - core index']
  #allocation1 [shape = 'u32[144,128]{1,0:T(1,128)}', space=vmem, size = 0x12000, scoped, tag = 'internal scratch']
  %s0 = inlined_call_operand.vmem [shape: f32[32,16], index: 0, kind: input, shape index: {}]
  %s1 = inlined_call_operand.vmem [shape: f32[16,12], index: 1, kind: input, shape index: {}]
  %s2 = inlined_call_operand.vmem [shape: bf16[32,12], index: 2, kind: output, shape index: {}]
  %s3 = sld [smem:[#allocation0]]
  $region18: #{tpu_custom_call.1} parent=0
    _
  %s5 = ssub.s32 1, %s3
  %s6 = scalar_select 0, %s5, %s3
  // Predicated region
  $region2: #{tpu_custom_call.1} parent=0 // pred_check
    _
  $region3: #{tpu_custom_call.1} parent=0 // pred_check_branch
    %8 = sbr.rel (0) target = $region5
  $region4: #{tpu_custom_call.1} parent=0 // pred_region
    _
  $region5: #{tpu_custom_call.1} parent=0 // pred_fallthru
    _
  // Predicated region
  $region6: #{tpu_custom_call.1} parent=0 // pred_check
    _
  $region7: #{tpu_custom_call.1} parent=0 // pred_check_branch
    %10 = sbr.rel (0) target = $region9
  $region8: #{tpu_custom_call.1} parent=0 // pred_region
    _
  $region9: #{tpu_custom_call.1} parent=0 // pred_fallthru
    _
  %v11 = vld [vmem:[%s0] sm:$0xff]
  %v12 = vld [vmem:[%s0 + $0x8] sm:$0xff]
  %v13 = vld [vmem:[%s0 + $0x10] sm:$0xff]
  %v14 = vld [vmem:[%s0 + $0x18] sm:$0xff]
  %v15 = vld [vmem:[%s1] sm:$0xff]
  %v16 = vld [vmem:[%s1 + $0x8] sm:$0xff]
  %vm17 = vcmask 130048
  %v19 = vsel %vm17, %v11, 0
  %v22 = vsel %vm17, %v12, 0
  %v25 = vsel %vm17, %v13, 0
  %v28 = vsel %vm17, %v14, 0
  %30 = vmatprep.subr.mxu0 0.0
  %31 = vmatpush1.msra.mxu0 %v15
  %32 = vmatprep.subr.mxu0 0.0
  %33 = vmatpush1.msra.mxu0 %v16
  %34 = vmatprep.subr.mxu0 0.0
  %35 = vmatpush1.msra.mxu0 0.0
  %36 = vmatprep.subr.mxu0 0.0
  %37 = vmatpush1.msra.mxu0 0.0
  %38 = vmatprep.subr.mxu0 0.0
  %39 = vmatpush1.msra.mxu0 0.0
  %40 = vmatprep.subr.mxu0 0.0
  %41 = vmatpush1.msra.mxu0 0.0
  %42 = vmatprep.subr.mxu0 0.0
  %43 = vmatpush1.msra.mxu0 0.0
  %44 = vmatprep.subr.mxu0 0.0
  %45 = vmatpush1.msra.mxu0 0.0
  %46 = vmatprep.subr.mxu0 0.0
  %47 = vmatpush1.msra.mxu0 0.0
  %48 = vmatprep.subr.mxu0 0.0
  %49 = vmatpush1.msra.mxu0 0.0
  %50 = vmatprep.subr.mxu0 0.0
  %51 = vmatpush1.msra.mxu0 0.0
  %52 = vmatprep.subr.mxu0 0.0
  %53 = vmatpush1.msra.mxu0 0.0
  %54 = vmatprep.subr.mxu0 0.0
  %55 = vmatpush1.msra.mxu0 0.0
  %56 = vmatprep.subr.mxu0 0.0
  %57 = vmatpush1.msra.mxu0 0.0
  %58 = vmatprep.subr.mxu0 0.0
  %59 = vmatpush1.msra.mxu0 0.0
  %60 = vmatprep.subr.mxu0 0.0
  %61 = vmatpush1.msra.mxu0 0.0
  %62 = vmatprep.subr.mxu0 0.0
  %63 = vmatpush1.msra.mxu0 0.0
  %64 = vmatprep.subr.mxu0 0.0
  %65 = vmatpush1.msra.mxu0 0.0
  %66 = vmatprep.subr.mxu0 0.0
  %67 = vmatpush1.msra.mxu0 0.0
  %68 = vmatprep.subr.mxu0 0.0
  %69 = vmatpush1.msra.mxu0 0.0
  %70 = vmatprep.subr.mxu0 0.0
  %71 = vmatpush1.msra.mxu0 0.0
  %72 = vmatprep.subr.mxu0 0.0
  %73 = vmatpush1.msra.mxu0 0.0
  %74 = vmatprep.subr.mxu0 0.0
  %75 = vmatpush1.msra.mxu0 0.0
  %76 = vmatprep.subr.mxu0 0.0
  %77 = vmatpush1.msra.mxu0 0.0
  %78 = vmatprep.subr.mxu0 0.0
  %79 = vmatpush1.msra.mxu0 0.0
  %80 = vmatprep.subr.mxu0 0.0
  %81 = vmatpush1.msra.mxu0 0.0
  %82 = vmatprep.subr.mxu0 0.0
  %83 = vmatpush1.msra.mxu0 0.0
  %84 = vmatprep.subr.mxu0 0.0
  %85 = vmatpush1.msra.mxu0 0.0
  %86 = vmatprep.subr.mxu0 0.0
  %87 = vmatpush1.msra.mxu0 0.0
  %88 = vmatprep.subr.mxu0 0.0
  %89 = vmatpush1.msra.mxu0 0.0
  %90 = vmatprep.subr.mxu0 0.0
  %91 = vmatpush1.msra.mxu0 0.0
  %92 = vmatprep.subr.mxu0 0.0
  %93 = vmatpush1.msra.mxu0 0.0
  %94 = vmatprep.mubr.f32.mxu0 0.0
  %95 = vmatmul.mubr.f32.gmra.mrb[0].mxu0 %v19
  %v96 = vpop.f32.mrb[0].mxu0
  %v97 = vadd.f32 0.0, %v96
  %v98 = vpop.f32.mrb[0].mxu0
  %99 = vmatprep.mubr.f32.mxu0 0.0
  %100 = vmatmul.mubr.f32.gmra.mrb[0].mxu0 %v22
  %v101 = vpop.f32.mrb[0].mxu0
  %v102 = vadd.f32 0.0, %v101
  %v103 = vpop.f32.mrb[0].mxu0
  %104 = vmatprep.mubr.f32.mxu0 0.0
  %105 = vmatmul.mubr.f32.gmra.mrb[0].mxu0 %v25
  %v106 = vpop.f32.mrb[0].mxu0
  %v107 = vadd.f32 0.0, %v106
  %v108 = vpop.f32.mrb[0].mxu0
  %109 = vmatprep.mubr.f32.mxu0 0.0
  %110 = vmatmul.mubr.f32.gmra.mrb[0].mxu0 %v28
  %v111 = vpop.f32.mrb[0].mxu0
  %v112 = vadd.f32 0.0, %v111
  %v113 = vpop.f32.mrb[0].mxu0
  %114 = vdwg.mxu0
  %v115 = vpack.c.bf16 %v102, %v97
  %v116 = vpack.c.bf16 %v112, %v107
  %v119 = vunpack.c.l.b16 %v115
  %v120 = vunpack.c.h.b16 %v115
  %v121 = vunpack.c.l.b16 %v116
  %v122 = vunpack.c.h.b16 %v116
  %v123 = vpack.c.b16 %v119, %v119
  %v124 = vpack.c.b16 %v120, %v120
  %v125 = vpack.c.b16 %v121, %v121
  %v126 = vpack.c.b16 %v122, %v122
  %vm131 = vcmask 93184
  %132 = vst.msk [vmem:[%s2] sm:$0xf] %vm131, %v123
  %133 = vst.msk [vmem:[%s2 + $0x4] sm:$0xf] %vm131, %v124
  %134 = vst.msk [vmem:[%s2 + $0x8] sm:$0xf] %vm131, %v125
  %135 = vst.msk [vmem:[%s2 + $0xc] sm:$0xf] %vm131, %v126
  // Predicated region
  $region10: #{tpu_custom_call.1} parent=0 // pred_check
    _
  $region11: #{tpu_custom_call.1} parent=0 // pred_check_branch
    %137 = sbr.rel (0) target = $region13
  $region12: #{tpu_custom_call.1} parent=0 // pred_region
    _
  $region13: #{tpu_custom_call.1} parent=0 // pred_fallthru
    _
  // Predicated region
  $region14: #{tpu_custom_call.1} parent=0 // pred_check
    _
  $region15: #{tpu_custom_call.1} parent=0 // pred_check_branch
    %139 = sbr.rel (0) target = $region17
  $region16: #{tpu_custom_call.1} parent=0 // pred_region
    _
  $region17: #{tpu_custom_call.1} parent=0 // pred_fallthru
    _

</llo_original>
